<compile_context>
chip_gen: v5e
topology: v5e:2x2
jax: 0.10.0
libtpu: 0.0.40
codegen_flags: <defaults>
</compile_context>

<pallas_src>
import jax
import jax.numpy as jnp
from jax.experimental import pallas as pl
from jax.experimental.pallas import tpu as pltpu

B, L, H, V = 2, 16, 32, 128       # batch, seq, hidden, vocab (incl. mask token)
N = B * L                         # flattened token count
TILE = L                          # tokens per grid block (batch-aligned)
MASK_IDX = V - 1
EPS = 1e-3
NEG_INF = -1e9                    # finite on purpose: val_x0 may gather it when
                                  # x0 == MASK; tmask zeroes it, a true -inf
                                  # would produce inf*0 = NaN in the nll sum.


# --------------------------- fused model + loss kernel -----------------------
def _fused_kernel(ints_ref, tab_ref, coef_ref, net_ref, stats_ref):
    b = pl.program_id(0)

    ints = ints_ref[...]                                   # [TILE,3] i32: xt,x0,attn
    xt = ints[:, 0:1]
    x0 = ints[:, 1:2]
    attn = ints[:, 2:3]

    iota_v = jax.lax.broadcasted_iota(jnp.int32, (TILE, V), 1)

    # --- model: net[n,:] = (emb @ w)[xt[n], :] as one-hot x table MXU matmul.
    # TODO(synk): for realistic vocab (V >= 8K) drop the [V,V] table + one-hot
    # matmul (O(V^2) memory, O(N*V^2) flops) and instead gather emb[xt]
    # (scalar-prefetch xt + pl.Element index_map) followed by a
    # [TILE,H] x [H,V] MXU matmul.
    onehot = (iota_v == xt).astype(jnp.bfloat16)           # exact 0/1 in bf16
    net = jnp.dot(onehot, tab_ref[...],                    # [TILE,V] f32 accumulate
                  preferred_element_type=jnp.float32)
    net_ref[...] = net.astype(jnp.bfloat16)                # bf16 writeback

    # --- scheduler.output_to_logits (SUBS) reduced to what the loss needs.
    # The carry-over branch is dropped: token_mask requires xt == MASK_IDX,
    # under which carry-over never applies, so it cannot affect the reductions.
    out = jnp.where(iota_v == MASK_IDX, NEG_INF, net)      # suppress mask lane
    m = jnp.max(out, axis=-1, keepdims=True)               # [TILE,1]
    lse = m + jnp.log(jnp.sum(jnp.exp(out - m), axis=-1, keepdims=True))

    # log p_theta(x0) = out[x0] - lse  (one-hot gather along vocab lanes)
    val_x0 = jnp.sum(jnp.where(iota_v == x0, out, 0.0), axis=-1, keepdims=True)
    log_p = val_x0 - lse                                   # [TILE,1]

    # argmax(logits) == x0  <=>  out[x0] == row max (log-softmax is a monotone
    # per-row shift; exact-tie corner case is excluded by the token mask).
    correct = (val_x0 == m).astype(jnp.float32)            # [TILE,1]

    # token_mask = attn_mask & (x0 != mask) & (xt == mask)
    trans = jnp.logical_and(x0 != MASK_IDX, xt == MASK_IDX)
    tmask = jnp.logical_and(attn != 0, trans).astype(jnp.float32)   # [TILE,1]

    c = coef_ref[b]                                        # per-batch scalar (SMEM)
    nll = -log_p * tmask * c                               # [TILE,1]

    # Fuse the three reductions into a single sublane reduce over [TILE,3].
    lane3 = jax.lax.broadcasted_iota(jnp.int32, (TILE, 3), 1)
    cols = jnp.where(lane3 == 0, nll,
                     jnp.where(lane3 == 1, tmask, correct * tmask))
    stats_ref[0] = jnp.sum(cols, axis=0, keepdims=True)    # (1,3): nll,count,correct


# ---------------------------------- wrapper ----------------------------------
def mdlm_loss(x0, conds, tab_bf16, key, labels=None):
    kt, kn = jax.random.split(key)
    # t = (1 - eps) * rand(B) + eps
    t = (1.0 - EPS) * jax.random.uniform(kt, (B,), dtype=jnp.float32) + EPS
    sigma_bar_t = -jnp.log1p(-(1.0 - EPS) * t)
    sigma_t = (1.0 - EPS) / (1.0 - (1.0 - EPS) * t)

    # scheduler.add_noise(x0, t): mask with prob 1 - exp(-sigma_bar) = (1-eps)*t
    move_chance = 1.0 - jnp.exp(-sigma_bar_t)
    u = jax.random.uniform(kn, (B, L), dtype=jnp.float32)
    xt = jnp.where(u < move_chance[:, None], MASK_IDX, x0)

    # xt[:, :conds.shape[1]][conds] = x0[:, :conds.shape[1]][conds]
    Lc = conds.shape[1]
    xt = xt.at[:, :Lc].set(jnp.where(conds, x0[:, :Lc], xt[:, :Lc]))

    attn = jnp.ones((B, L), jnp.int32) if labels is None else labels.astype(jnp.int32)
    coef = (sigma_t / jnp.expm1(sigma_bar_t)).astype(jnp.float32)   # [B]

    # Pack the three int inputs into one lane-packed (N,3) i32 array.
    ints = jnp.stack(
        [xt.astype(jnp.int32), x0.astype(jnp.int32), attn], axis=-1
    ).reshape(N, 3)

    cost = pl.CostEstimate(
        flops=2 * N * V * V,
        transcendentals=N * V + N,
        bytes_accessed=(N * 3 * 4) + (V * V * 2) + (B * 4) + (N * V * 2) + (B * 3 * 4),
    )

    net_flat, part_stats = pl.pallas_call(
        _fused_kernel,
        grid=(B,),
        out_shape=(
            jax.ShapeDtypeStruct((N, V), jnp.bfloat16),   # model output (bf16, lane-dense)
            jax.ShapeDtypeStruct((B, 1, 3), jnp.float32), # per-block partial stats
        ),
        in_specs=[
            pl.BlockSpec((TILE, 3), lambda b: (b, 0)),            # packed ints
            pl.BlockSpec((V, V), lambda b: (0, 0)),               # table: fetched once
            pl.BlockSpec(memory_space=pltpu.MemorySpace.SMEM),    # coef [B]
        ],
        out_specs=(
            pl.BlockSpec((TILE, V), lambda b: (b, 0)),
            pl.BlockSpec((1, 1, 3), lambda b: (b, 0, 0)),
        ),
        compiler_params=pltpu.CompilerParams(dimension_semantics=("parallel",)),
        cost_estimate=cost,
    )(ints, tab_bf16, coef)

    stats = jnp.sum(part_stats[:, 0, :], axis=0)          # (3,): nll_sum, count, correct
    nll_sum, count, correct = stats[0], stats[1], stats[2]
    denom = jnp.maximum(count, 1.0)
    loss = jnp.where(count == 0, 0.0, nll_sum / denom)
    token_accuracy = jnp.where(count == 0, 0.0, correct / denom)
    net_out = net_flat.reshape(B, L, V)
    return loss, token_accuracy, count, xt, net_out, coef.reshape(B, 1)


# ------------------------------ pure-JAX reference ---------------------------
def _reference(net_out, xt, x0, attn, coef):
    iota_v = jax.lax.broadcasted_iota(jnp.int32, net_out.shape, 2)
    out = jnp.where(iota_v == MASK_IDX, net_out + NEG_INF, net_out)
    logits = out - jax.scipy.special.logsumexp(out, axis=-1, keepdims=True)
    unmasked = (xt != MASK_IDX)[..., None]
    carry = jnp.where(iota_v == xt[..., None], 0.0, NEG_INF)
    logits = jnp.where(unmasked, carry, logits)
    log_p = jnp.take_along_axis(logits, x0[..., None], axis=-1)[..., 0]
    mx = jnp.max(logits, axis=-1, keepdims=True)
    pred = jnp.min(jnp.where(logits == mx, iota_v, V), axis=-1)
    trans = jnp.logical_and(x0 != MASK_IDX, xt == MASK_IDX)
    tmask = jnp.logical_and(attn != 0, trans).astype(jnp.float32)
    loss = -log_p * coef
    cnt = jnp.sum(tmask)
    return (jnp.sum(loss * tmask) / jnp.maximum(cnt, 1.0),
            jnp.sum((pred == x0) * tmask) / jnp.maximum(cnt, 1.0),
            cnt)


if __name__ == "__main__":
    key = jax.random.PRNGKey(0)
    k_tok, k_cond, k_emb, k_w, k_fwd = jax.random.split(key, 5)

    x0 = jax.random.randint(k_tok, (B, L), 0, MASK_IDX, dtype=jnp.int32)
    conds = jax.random.bernoulli(k_cond, 0.5, (B, 4))           # conditioning mask
    emb = 0.05 * jax.random.normal(k_emb, (V, H), dtype=jnp.float32)
    w = 0.05 * jax.random.normal(k_w, (H, V), dtype=jnp.float32)

    # Init-time precompute (done once, not per step): the synthetic model
    # net(xt) = emb[xt] @ w == (emb @ w)[xt], folded into one bf16 table.
    tab_bf16 = (emb @ w).astype(jnp.bfloat16)                   # [V, V]

    loss, acc, count, xt, net_out, coef = mdlm_loss(x0, conds, tab_bf16, k_fwd)
    jax.block_until_ready((loss, acc, count, net_out))

    # Independent check of the model path: kernel net_out must equal tab[xt].
    net_expected = tab_bf16[xt.reshape(N)].astype(jnp.float32).reshape(B, L, V)
    assert jnp.allclose(net_out.astype(jnp.float32), net_expected,
                        rtol=1e-2, atol=1e-3), "model path mismatch"

    # Cross-check the fused loss path against pure JAX.
    attn = jnp.ones((B, L), jnp.int32)
    ref_loss, ref_acc, ref_cnt = _reference(net_out.astype(jnp.float32),
                                            xt, x0, attn, coef)
    assert jnp.allclose(loss, ref_loss, rtol=1e-3, atol=1e-3), (loss, ref_loss)
    assert jnp.allclose(acc, ref_acc, rtol=1e-3, atol=1e-3), (acc, ref_acc)
    assert jnp.allclose(count, ref_cnt), (count, ref_cnt)

    print("KERNEL_OK")
</pallas_src>

<mosaic_0001>
module attributes {stable_mosaic.version = 11 : i64} {
  func.func @_fused_kernel(%arg0: i32, %arg1: memref<16x3xi32, #tpu.memory_space<vmem>>, %arg2: memref<128x128xbf16, #tpu.memory_space<vmem>>, %arg3: memref<2xf32, #tpu.memory_space<smem>>, %arg4: memref<16x128xbf16, #tpu.memory_space<vmem>>, %arg5: memref<1x1x3xf32, #tpu.memory_space<vmem>>) attributes {dimension_semantics = [#tpu.dimension_semantics<parallel>], iteration_bounds = array<i64: 2>, scalar_prefetch = 0 : i64, scratch_operands = 0 : i64, tpu.core_type = #tpu.core_type<tc>, window_params = [{transform_indices = @transform_0, window_bounds = array<i64: 16, 3>}, {pipeline_mode = #tpu.pipeline_mode<synchronous>, transform_indices = @transform_1, window_bounds = array<i64: 128, 128>}, {transform_indices = @transform_2, window_bounds = array<i64: 2>}, {transform_indices = @transform_3, window_bounds = array<i64: 16, 128>}, {transform_indices = @transform_4, window_bounds = array<i64: 1, 1, 3>}]} {
    %c0 = arith.constant 0 : index
    %c0_0 = arith.constant 0 : index
    %0 = vector.load %arg1[%c0, %c0_0] : memref<16x3xi32, #tpu.memory_space<vmem>>, vector<16x3xi32>
    %1 = vector.extract_strided_slice %0 {offsets = [0, 0], sizes = [16, 1], strides = [1, 1]} : vector<16x3xi32> to vector<16x1xi32>
    %2 = vector.extract_strided_slice %0 {offsets = [0, 1], sizes = [16, 1], strides = [1, 1]} : vector<16x3xi32> to vector<16x1xi32>
    %3 = vector.extract_strided_slice %0 {offsets = [0, 2], sizes = [16, 1], strides = [1, 1]} : vector<16x3xi32> to vector<16x1xi32>
    %4 = tpu.iota {dimensions = array<i32: 1>} : vector<16x128xi32>
    %5 = vector.broadcast %1 : vector<16x1xi32> to vector<16x128xi32>
    %6 = arith.cmpi eq, %4, %5 : vector<16x128xi32>
    %7 = arith.extui %6 : vector<16x128xi1> to vector<16x128xi32>
    %8 = arith.sitofp %7 : vector<16x128xi32> to vector<16x128xf32>
    %9 = arith.truncf %8 : vector<16x128xf32> to vector<16x128xbf16>
    %c0_1 = arith.constant 0 : index
    %c0_2 = arith.constant 0 : index
    %10 = vector.load %arg2[%c0_1, %c0_2] : memref<128x128xbf16, #tpu.memory_space<vmem>>, vector<128x128xbf16>
    %cst = arith.constant dense<0.000000e+00> : vector<16x128xf32>
    %11 = tpu.matmul %9, %10, %cst {dimension_numbers = #tpu.dot_dimension_numbers<[1], [0], [0], [1], [0, 0, 1, 1], [], []>} : vector<16x128xbf16>, vector<128x128xbf16>, vector<16x128xf32> -> vector<16x128xf32>
    %12 = arith.truncf %11 : vector<16x128xf32> to vector<16x128xbf16>
    %c0_3 = arith.constant 0 : index
    %c0_4 = arith.constant 0 : index
    %13 = vector.load %arg4[%c0_3, %c0_4] : memref<16x128xbf16, #tpu.memory_space<vmem>>, vector<16x128xbf16>
    tpu.vector_store %arg4[%c0_3, %c0_4], %12 {strides = array<i32>} : memref<16x128xbf16, #tpu.memory_space<vmem>>, vector<16x128xbf16>,
    %c127_i32 = arith.constant 127 : i32
    %14 = vector.broadcast %c127_i32 : i32 to vector<16x128xi32>
    %15 = arith.cmpi eq, %4, %14 : vector<16x128xi32>
    %cst_5 = arith.constant -1.000000e+09 : f32
    %16 = vector.broadcast %cst_5 : f32 to vector<16x128xf32>
    %17 = arith.select %15, %16, %11 : vector<16x128xi1>, vector<16x128xf32>
    %cst_6 = arith.constant dense<0xFF800000> : vector<16xf32>
    %18 = vector.multi_reduction <maximumf>, %17, %cst_6 [1] : vector<16x128xf32> to vector<16xf32>
    %19 = vector.shape_cast %18 : vector<16xf32> to vector<16x1xf32>
    %20 = vector.broadcast %19 : vector<16x1xf32> to vector<16x128xf32>
    %21 = arith.subf %17, %20 : vector<16x128xf32>
    %22 = math.exp %21 : vector<16x128xf32>
    %cst_7 = arith.constant dense<0.000000e+00> : vector<16xf32>
    %23 = vector.multi_reduction <add>, %22, %cst_7 [1] : vector<16x128xf32> to vector<16xf32>
    %24 = vector.shape_cast %23 : vector<16xf32> to vector<16x1xf32>
    %25 = math.log %24 : vector<16x1xf32>
    %26 = arith.addf %19, %25 : vector<16x1xf32>
    %27 = vector.broadcast %2 : vector<16x1xi32> to vector<16x128xi32>
    %28 = arith.cmpi eq, %4, %27 : vector<16x128xi32>
    %cst_8 = arith.constant 0.000000e+00 : f32
    %29 = vector.broadcast %cst_8 : f32 to vector<16x128xf32>
    %30 = arith.select %28, %17, %29 : vector<16x128xi1>, vector<16x128xf32>
    %cst_9 = arith.constant dense<0.000000e+00> : vector<16xf32>
    %31 = vector.multi_reduction <add>, %30, %cst_9 [1] : vector<16x128xf32> to vector<16xf32>
    %32 = vector.shape_cast %31 : vector<16xf32> to vector<16x1xf32>
    %33 = arith.subf %32, %26 : vector<16x1xf32>
    %34 = arith.cmpf oeq, %32, %19 : vector<16x1xf32>
    %35 = arith.extui %34 : vector<16x1xi1> to vector<16x1xi32>
    %36 = arith.sitofp %35 : vector<16x1xi32> to vector<16x1xf32>
    %c127_i32_10 = arith.constant 127 : i32
    %37 = vector.broadcast %c127_i32_10 : i32 to vector<16x1xi32>
    %38 = arith.cmpi ne, %2, %37 : vector<16x1xi32>
    %c127_i32_11 = arith.constant 127 : i32
    %39 = vector.broadcast %c127_i32_11 : i32 to vector<16x1xi32>
    %40 = arith.cmpi eq, %1, %39 : vector<16x1xi32>
    %41 = arith.andi %38, %40 : vector<16x1xi1>
    %c0_i32 = arith.constant 0 : i32
    %42 = vector.broadcast %c0_i32 : i32 to vector<16x1xi32>
    %43 = arith.cmpi ne, %3, %42 : vector<16x1xi32>
    %44 = arith.andi %43, %41 : vector<16x1xi1>
    %45 = arith.extui %44 : vector<16x1xi1> to vector<16x1xi32>
    %46 = arith.sitofp %45 : vector<16x1xi32> to vector<16x1xf32>
    %47 = arith.index_cast %arg0 : i32 to index
    %48 = memref.load %arg3[%47] : memref<2xf32, #tpu.memory_space<smem>>
    %cst_12 = arith.constant 0.000000e+00 : f32
    %49 = vector.broadcast %cst_12 : f32 to vector<16x1xf32>
    %50 = arith.subf %49, %33 : vector<16x1xf32>
    %51 = arith.mulf %50, %46 : vector<16x1xf32>
    %52 = vector.broadcast %48 : f32 to vector<16x1xf32>
    %53 = arith.mulf %51, %52 : vector<16x1xf32>
    %54 = tpu.iota {dimensions = array<i32: 1>} : vector<16x3xi32>
    %c0_i32_13 = arith.constant 0 : i32
    %55 = vector.broadcast %c0_i32_13 : i32 to vector<16x3xi32>
    %56 = arith.cmpi eq, %54, %55 : vector<16x3xi32>
    %c1_i32 = arith.constant 1 : i32
    %57 = vector.broadcast %c1_i32 : i32 to vector<16x3xi32>
    %58 = arith.cmpi eq, %54, %57 : vector<16x3xi32>
    %59 = arith.mulf %36, %46 : vector<16x1xf32>
    %60 = vector.shape_cast %46 : vector<16x1xf32> to vector<16x1xf32>
    %61 = vector.broadcast %60 : vector<16x1xf32> to vector<16x3xf32>
    %62 = vector.shape_cast %59 : vector<16x1xf32> to vector<16x1xf32>
    %63 = vector.broadcast %62 : vector<16x1xf32> to vector<16x3xf32>
    %64 = arith.select %58, %61, %63 : vector<16x3xi1>, vector<16x3xf32>
    %65 = vector.shape_cast %53 : vector<16x1xf32> to vector<16x1xf32>
    %66 = vector.broadcast %65 : vector<16x1xf32> to vector<16x3xf32>
    %67 = arith.select %56, %66, %64 : vector<16x3xi1>, vector<16x3xf32>
    %cst_14 = arith.constant dense<0.000000e+00> : vector<3xf32>
    %68 = vector.multi_reduction <add>, %67, %cst_14 [0] : vector<16x3xf32> to vector<3xf32>
    %69 = vector.shape_cast %68 : vector<3xf32> to vector<1x3xf32>
    %c0_15 = arith.constant 0 : index
    %c0_16 = arith.constant 0 : index
    %c0_17 = arith.constant 0 : index
    %70 = vector.load %arg5[%c0_15, %c0_16, %c0_17] : memref<1x1x3xf32, #tpu.memory_space<vmem>>, vector<1x1x3xf32>
    %71 = vector.shape_cast %70 : vector<1x1x3xf32> to vector<1x3xf32>
    %72 = vector.shape_cast %69 : vector<1x3xf32> to vector<1x1x3xf32>
    tpu.vector_store %arg5[%c0_15, %c0_16, %c0_17], %72 {strides = array<i32>} : memref<1x1x3xf32, #tpu.memory_space<vmem>>, vector<1x1x3xf32>,
    return
  }
  func.func @transform_0(%arg0: i32) -> (i32, i32) {
    %c0_i32 = arith.constant 0 : i32
    %c0_i32_0 = arith.constant 0 : i32
    return %arg0, %c0_i32 : i32, i32
  }
  func.func @transform_1(%arg0: i32) -> (i32, i32) {
    %c0_i32 = arith.constant 0 : i32
    %c0_i32_0 = arith.constant 0 : i32
    %c0_i32_1 = arith.constant 0 : i32
    return %c0_i32, %c0_i32_0 : i32, i32
  }
  func.func @transform_2(%arg0: i32) -> i32 {
    %c0_i32 = arith.constant 0 : i32
    %c0_i32_0 = arith.constant 0 : i32
    return %c0_i32 : i32
  }
  func.func @transform_3(%arg0: i32) -> (i32, i32) {
    %c0_i32 = arith.constant 0 : i32
    %c0_i32_0 = arith.constant 0 : i32
    return %arg0, %c0_i32 : i32, i32
  }
  func.func @transform_4(%arg0: i32) -> (i32, i32, i32) {
    %c0_i32 = arith.constant 0 : i32
    %c0_i32_0 = arith.constant 0 : i32
    %c0_i32_1 = arith.constant 0 : i32
    return %arg0, %c0_i32, %c0_i32_0 : i32, i32, i32
  }
}

</mosaic_0001>

<llo_original>
// kernel: tpu_custom_call.1
$region0: #{tpu_custom_call.1}
  #allocation0 [shape = 'u32[]', space=smem, size = 0x4, offset = 0x4, fixed_abs, tag = 'smem constant byte address 0x4 - core index']
  #allocation1 [shape = 'u32[72,128]{1,0:T(1,128)}', space=vmem, size = 0x9000, scoped, tag = 'internal scratch']
  %s0 = inlined_call_operand.vmem [shape: s32[32,3], index: 0, kind: input, shape index: {}]
  %s1 = inlined_call_operand.hbm [shape: bf16[128,128], index: 1, kind: input, shape index: {}]
  %s2 = inlined_call_operand.vmem [shape: f32[2], index: 2, kind: input, shape index: {}]
  %s3 = inlined_call_operand.hbm [shape: bf16[32,128], index: 3, kind: output, shape index: {0}]
  %s4 = inlined_call_operand.hbm [shape: f32[2,1,3], index: 4, kind: output, shape index: {1}]
  %5 = xla_tuple %s3, %s4
  %s6 = sld [smem:[#allocation0]]
  $region61: #{tpu_custom_call.1} parent=0
    _
  %s8 = ssub.s32 1, %s6
  %s9 = scalar_select 0, %s8, %s6
  $region1: #{tpu_custom_call.1} parent=0
    #allocation2 [shape = 'u8[32768]{0}', space=vmem, size = 0x8000, scoped, tag = 'input window, operand 1, single buffered']
    #allocation3 [shape = 's32[2]{0}', space=sflag, size = 0x8, scoped, tag = 'scoped memory for tpu_custom_call.1']
    #allocation4 [shape = 's32[2]{0}', space=sflag, size = 0x8, scoped, tag = 'scoped memory for tpu_custom_call.1']
    #allocation5 [shape = 's32[2]{0}', space=sflag, size = 0x8, scoped, tag = 'scoped memory for tpu_custom_call.1']
    #allocation6 [shape = 'u8[512]{0}', space=smem, size = 0x200, scoped, tag = 'input window, operand 2, single buffered']
    #allocation7 [shape = 'u8[8192]{0}', space=vmem, size = 0x2000, scoped, tag = 'output window, operand 0']
    #allocation8 [shape = 'u8[1024]{0}', space=vmem, size = 0x400, scoped, tag = 'output window, operand 1']
    #allocation9 [shape = 's32[2]{0}', space=sflag, size = 0x8, scoped, tag = 'scoped memory for tpu_custom_call.1']
    %10 = vsyncpa [#allocation3], 0
    %11 = vsyncpa [#allocation5], 0
    %12 = vsyncpa [#allocation4], 0
    %s13 = scalar_lea.sflag [#allocation4], 1
    %14 = vsyncpa %s13, 0
    %15 = vsyncpa [#allocation9], 0
    %s16 = scalar_lea.sflag [#allocation9], 1
    %17 = vsyncpa %s16, 0
    loop: start=0, step=1, limit=4
    $region2: #{tpu_custom_call.1} parent=1 // loop_pre_header
      _
    $region3: #{tpu_custom_call.1} parent=1 // loop_header
      %s19 = sphi 0, %s23
      %p20 = scmp.ge.s32.totalorder %s19, 4
      %s29 = sphi 0, %s31
      %s32 = sphi 0, %s29
      %s33 = sphi 0, %s32
      %s49 = sphi 0, %s33
      %s53 = sphi 0, %s53
      %s55 = sphi 0, %s53
      %s56 = sphi 0, %s55
      %s70 = sphi 0, %s56
      %s74 = sphi 0, %s74
      %s76 = sphi 0, %s74
      %s77 = sphi 0, %s76
      %s91 = sphi 0, %s77
      %s97 = sphi 0, %s99
      %s100 = sphi 0, %s97
      %s101 = sphi 0, %s100
      %s117 = sphi 0, %s101
      %s123 = sphi 0, %s125
      %s126 = sphi 0, %s123
      %s127 = sphi 0, %s126
      %s143 = sphi 0, %s127
    $region4: #{tpu_custom_call.1} parent=1 // loop_header_branch
      %22 = sbr.rel (%p20) target = $region8
    $region5: #{tpu_custom_call.1} parent=1 // loop_body
      %s24 = ssub.s32 %s19, 1
      %s25 = ssub.s32 %s19, 2
      %s26 = sadd.s32 %s19, 1
      %s27 = ssub.s32 %s19, %s26
      %p28 = scmp.eq.s32.totalorder %s27, 0
      %s30 = sadd.s32 %s29, 1
      %s31 = scalar_select %p28, %s29, %s30
      %p34 = pneg %p28
      %p35 = scmp.eq.s32.totalorder %s19, 1
      %p36 = por %p34, %p35
      %p37 = scmp.ne.s32.totalorder %s29, %s32
      %p38 = scmp.eq.s32.totalorder %s19, 0
      %p39 = por %p37, %p38
      %p40 = scmp.ne.s32.totalorder %s29, %s32
      %p41 = scmp.eq.s32.totalorder %s24, 1
      %p42 = por %p40, %p41
      %p43 = scmp.ne.s32.totalorder %s32, %s33
      %p44 = scmp.eq.s32.totalorder %s24, 0
      %p45 = por %p43, %p44
      %p46 = scmp.ne.s32.totalorder %s32, %s33
      %p47 = scmp.eq.s32.totalorder %s25, 1
      %p48 = por %p46, %p47
      %p50 = scmp.ne.s32.totalorder %s33, %s49
      %p51 = scmp.eq.s32.totalorder %s25, 0
      %p52 = por %p50, %p51
      %s54 = sadd.s32 %s53, 1
      %p57 = scmp.eq.s32.totalorder %s19, 1
      %p58 = scmp.ne.s32.totalorder %s53, %s55
      %p59 = scmp.eq.s32.totalorder %s19, 0
      %p60 = por %p58, %p59
      %p61 = scmp.ne.s32.totalorder %s53, %s55
      %p62 = scmp.eq.s32.totalorder %s24, 1
      %p63 = por %p61, %p62
      %p64 = scmp.ne.s32.totalorder %s55, %s56
      %p65 = scmp.eq.s32.totalorder %s24, 0
      %p66 = por %p64, %p65
      %p67 = scmp.ne.s32.totalorder %s55, %s56
      %p68 = scmp.eq.s32.totalorder %s25, 1
      %p69 = por %p67, %p68
      %p71 = scmp.ne.s32.totalorder %s56, %s70
      %p72 = scmp.eq.s32.totalorder %s25, 0
      %p73 = por %p71, %p72
      %s75 = sadd.s32 %s74, 1
      %p78 = scmp.eq.s32.totalorder %s19, 1
      %p79 = scmp.ne.s32.totalorder %s74, %s76
      %p80 = scmp.eq.s32.totalorder %s19, 0
      %p81 = por %p79, %p80
      %p82 = scmp.ne.s32.totalorder %s74, %s76
      %p83 = scmp.eq.s32.totalorder %s24, 1
      %p84 = por %p82, %p83
      %p85 = scmp.ne.s32.totalorder %s76, %s77
      %p86 = scmp.eq.s32.totalorder %s24, 0
      %p87 = por %p85, %p86
      %p88 = scmp.ne.s32.totalorder %s76, %s77
      %p89 = scmp.eq.s32.totalorder %s25, 1
      %p90 = por %p88, %p89
      %p92 = scmp.ne.s32.totalorder %s77, %s91
      %p93 = scmp.eq.s32.totalorder %s25, 0
      %p94 = por %p92, %p93
      %s95 = ssub.s32 %s19, %s26
      %p96 = scmp.eq.s32.totalorder %s95, 0
      %s98 = sadd.s32 %s97, 1
      %s99 = scalar_select %p96, %s97, %s98
      %p102 = pneg %p96
      %p103 = scmp.eq.s32.totalorder %s19, 1
      %p104 = por %p102, %p103
      %p105 = scmp.ne.s32.totalorder %s97, %s100
      %p106 = scmp.eq.s32.totalorder %s19, 0
      %p107 = por %p105, %p106
      %p108 = scmp.ne.s32.totalorder %s97, %s100
      %p109 = scmp.eq.s32.totalorder %s24, 1
      %p110 = por %p108, %p109
      %p111 = scmp.ne.s32.totalorder %s100, %s101
      %p112 = scmp.eq.s32.totalorder %s24, 0
      %p113 = por %p111, %p112
      %p114 = scmp.ne.s32.totalorder %s100, %s101
      %p115 = scmp.eq.s32.totalorder %s25, 1
      %p116 = por %p114, %p115
      %p118 = scmp.ne.s32.totalorder %s101, %s117
      %p119 = scmp.eq.s32.totalorder %s25, 0
      %p120 = por %p118, %p119
      %s121 = ssub.s32 %s19, %s26
      %p122 = scmp.eq.s32.totalorder %s121, 0
      %s124 = sadd.s32 %s123, 1
      %s125 = scalar_select %p122, %s123, %s124
      %p128 = pneg %p122
      %p129 = scmp.eq.s32.totalorder %s19, 1
      %p130 = por %p128, %p129
      %p131 = scmp.ne.s32.totalorder %s123, %s126
      %p132 = scmp.eq.s32.totalorder %s19, 0
      %p133 = por %p131, %p132
      %p134 = scmp.ne.s32.totalorder %s123, %s126
      %p135 = scmp.eq.s32.totalorder %s24, 1
      %p136 = por %p134, %p135
      %p137 = scmp.ne.s32.totalorder %s126, %s127
      %p138 = scmp.eq.s32.totalorder %s24, 0
      %p139 = por %p137, %p138
      %p140 = scmp.ne.s32.totalorder %s126, %s127
      %p141 = scmp.eq.s32.totalorder %s25, 1
      %p142 = por %p140, %p141
      %p144 = scmp.ne.s32.totalorder %s127, %s143
      %p145 = scmp.eq.s32.totalorder %s25, 0
      %p146 = por %p144, %p145
      %p147 = scmp.le.s32.totalorder 1, %s19
      %p148 = scmp.lt.s32.totalorder %s19, 3
      %p149 = pnand %p147, %p148
      %p150 = pneg %p149
      // Predicated region
      $region9: #{tpu_custom_call.1} parent=5 // pred_check
        _
      $region10: #{tpu_custom_call.1} parent=5 // pred_check_branch
        %152 = sbr.rel (%p149) target = $region12
      $region11: #{tpu_custom_call.1} parent=5 // pred_region
        %s153 = ssub.s32 %s19, 1
        // Predicated region
        $region13: #{tpu_custom_call.1} parent=11 // pred_check
          %p154 = pneg %p66
        $region14: #{tpu_custom_call.1} parent=11 // pred_check_branch
          %156 = sbr.rel (%p154) target = $region16
        $region15: #{tpu_custom_call.1} parent=11 // pred_region
          %158 = vsyncadd [#allocation3], 0
          %s159 = sshll.u32 %s1, 4
          %s160 = int_to_ptr.hbm [resolvable:$true] %s159
          %s161 = sshll.u32 [#allocation2], 4
          %s162 = int_to_ptr.vmem [resolvable:$true] %s161
          %167 = dma.hbm_to_vmem [thread:$0]  %s160, 1024, %s162, [#allocation3], 64, 64, 4
        $region16: #{tpu_custom_call.1} parent=11 // pred_fallthru
          _
        // Predicated region
        $region17: #{tpu_custom_call.1} parent=11 // pred_check
          %p168 = pneg %p87
        $region18: #{tpu_custom_call.1} parent=11 // pred_check_branch
          %170 = sbr.rel (%p168) target = $region20
        $region19: #{tpu_custom_call.1} parent=11 // pred_region
          %172 = vsyncadd [#allocation5], 0
          %s174 = sshll.u32 %s2, 4
          %s175 = int_to_ptr.vmem [resolvable:$true] %s174
          %177 = dma.vmem_to_smem %s175, 16, [#allocation6], [#allocation5]
        $region20: #{tpu_custom_call.1} parent=11 // pred_fallthru
          _
      $region12: #{tpu_custom_call.1} parent=5 // pred_fallthru
        _
      %p178 = scmp.lt.s32.totalorder %s19, 2
      // Predicated region
      $region21: #{tpu_custom_call.1} parent=5 // pred_check
        %p179 = pneg %p178
      $region22: #{tpu_custom_call.1} parent=5 // pred_check_branch
        %181 = sbr.rel (%p179) target = $region24
      $region23: #{tpu_custom_call.1} parent=5 // pred_region
        // Predicated region
        $region25: #{tpu_custom_call.1} parent=23 // pred_check
          %p182 = pneg %p39
        $region26: #{tpu_custom_call.1} parent=23 // pred_check_branch
          %184 = sbr.rel (%p182) target = $region28
        $region27: #{tpu_custom_call.1} parent=23 // pred_region
          %s185 = smul.u32 2, %s19
          %p186 = scmp.lt.s32.totalorder %s185, 3
          %s187 = scalar_select %p186, %s185, 3
          %s188 = smul.addr %s187, 8
          %s189 = scalar_lea.vmem %s0, %s188
          %s190 = smul.u32 2, %s19
        $region28: #{tpu_custom_call.1} parent=23 // pred_fallthru
          _
      $region24: #{tpu_custom_call.1} parent=5 // pred_fallthru
        _
      %p191 = scmp.le.s32.totalorder 1, %s19
      %p192 = scmp.lt.s32.totalorder %s19, 3
      %p193 = pnand %p191, %p192
      %p194 = pneg %p193
      // Predicated region
      $region29: #{tpu_custom_call.1} parent=5 // pred_check
        _
      $region30: #{tpu_custom_call.1} parent=5 // pred_check_branch
        %196 = sbr.rel (%p193) target = $region32
      $region31: #{tpu_custom_call.1} parent=5 // pred_region
        %s197 = ssub.s32 %s19, 1
        // Predicated region
        $region33: #{tpu_custom_call.1} parent=31 // pred_check
          %p198 = pneg %p66
        $region34: #{tpu_custom_call.1} parent=31 // pred_check_branch
          %200 = sbr.rel (%p198) target = $region36
        $region35: #{tpu_custom_call.1} parent=31 // pred_region
          %202 = dma.done [#allocation3], 1024
        $region36: #{tpu_custom_call.1} parent=31 // pred_fallthru
          _
        // Predicated region
        $region37: #{tpu_custom_call.1} parent=31 // pred_check
          %p203 = pneg %p87
        $region38: #{tpu_custom_call.1} parent=31 // pred_check_branch
          %205 = sbr.rel (%p203) target = $region40
        $region39: #{tpu_custom_call.1} parent=31 // pred_region
          %207 = dma.done [#allocation5], 16
        $region40: #{tpu_custom_call.1} parent=31 // pred_fallthru
          _
        %208 = sfence
        %s209 = smul.u32 2, %s24
        %p210 = scmp.lt.s32.totalorder %s209, 3
        %s211 = scalar_select %p210, %s209, 3
        %s212 = smul.addr %s211, 8
        %s213 = scalar_lea.vmem %s0, %s212
        %p214 = pneg %p45
        %p215 = pneg %p42
        %p216 = pneg %p66
        %p217 = pneg %p63
        %p218 = pneg %p87
        %p219 = pneg %p84
        %p220 = pneg %p113
        %p221 = pneg %p110
        %s222 = sand.u32 %s100, 1
        %s223 = scalar_lea.sflag [#allocation4], %s222
        %s224 = sand.u32 %s100, 1
        %s225 = smul.addr %s224, 8
        %s226 = scalar_lea.vmem [#allocation7], %s225
        %p227 = pneg %p139
        %p228 = pneg %p136
        %s229 = sand.u32 %s126, 1
        %s230 = scalar_lea.sflag [#allocation9], %s229
        %s231 = sand.u32 %s126, 1
        %s232 = scalar_lea.vmem [#allocation8], %s231
        %s233 = smul.u32 2, %s24
        %p234 = scmp.lt.s32.totalorder %s233, 3
        %s235 = scalar_select %p234, %s233, 3
        %s236 = smul.addr %s235, 8
        %s237 = scalar_lea.vmem %s0, %s236
        %s238 = smul.u32 2, %s24
        %s239 = smul.u32 2, %s24
        %v240 = vld [vmem:[%s237] sm:$0xff]
        %v241 = vld [vmem:[%s237 + $0x8] sm:$0xff]
        %v242 = vlaneseq
        %v243 = vand.u32 %v242, 127
        %244 = vset.pattern.permute.xlu0 0
        %245 = vperm.xlu0 %244, %v240
        %v246 = vpop.permute.xlu0 %245
        %247 = vset.pattern.permute.xlu0 0
        %248 = vperm.xlu0 %247, %v241
        %v249 = vpop.permute.xlu0 %248
        %vm250 = vcmp.eq.s32.totalorder %v243, %v246
        %vm251 = vcmp.eq.s32.totalorder %v243, %v249
        %v252 = vsel %vm250, 1, 0
        %v253 = vsel %vm251, 1, 0
        %v254 = vcvt.s32.f32 %v252
        %v255 = vcvt.s32.f32 %v253
        %v256 = vpack.c.bf16 %v255, %v254
        %v257 = vld [vmem:[#allocation2] sm:$0xf]
        %v258 = vld [vmem:[#allocation2 + $0x4] sm:$0xf]
        %v259 = vld [vmem:[#allocation2 + $0x8] sm:$0xf]
        %v260 = vld [vmem:[#allocation2 + $0xc] sm:$0xf]
        %v261 = vld [vmem:[#allocation2 + $0x10] sm:$0xf]
        %v262 = vld [vmem:[#allocation2 + $0x14] sm:$0xf]
        %v263 = vld [vmem:[#allocation2 + $0x18] sm:$0xf]
        %v264 = vld [vmem:[#allocation2 + $0x1c] sm:$0xf]
        %v265 = vld [vmem:[#allocation2 + $0x20] sm:$0xf]
        %v266 = vld [vmem:[#allocation2 + $0x24] sm:$0xf]
        %v267 = vld [vmem:[#allocation2 + $0x28] sm:$0xf]
        %v268 = vld [vmem:[#allocation2 + $0x2c] sm:$0xf]
        %v269 = vld [vmem:[#allocation2 + $0x30] sm:$0xf]
        %v270 = vld [vmem:[#allocation2 + $0x34] sm:$0xf]
        %v271 = vld [vmem:[#allocation2 + $0x38] sm:$0xf]
        %v272 = vld [vmem:[#allocation2 + $0x3c] sm:$0xf]
        %v289 = vunpack.c.l.b16 %v257
        %v290 = vunpack.c.l.b16 %v258
        %v291 = vunpack.c.l.b16 %v259
        %v292 = vunpack.c.l.b16 %v260
        %v293 = vunpack.c.l.b16 %v261
        %v294 = vunpack.c.l.b16 %v262
        %v295 = vunpack.c.l.b16 %v263
        %v296 = vunpack.c.l.b16 %v264
        %v297 = vunpack.c.l.b16 %v265
        %v298 = vunpack.c.l.b16 %v266
        %v299 = vunpack.c.l.b16 %v267
        %v300 = vunpack.c.l.b16 %v268
        %v301 = vunpack.c.l.b16 %v269
        %v302 = vunpack.c.l.b16 %v270
        %v303 = vunpack.c.l.b16 %v271
        %v304 = vunpack.c.l.b16 %v272
        %v305 = vpack.c.b16 %v290, %v289
        %v306 = vpack.c.b16 %v292, %v291
        %v307 = vpack.c.b16 %v294, %v293
        %v308 = vpack.c.b16 %v296, %v295
        %v309 = vpack.c.b16 %v298, %v297
        %v310 = vpack.c.b16 %v300, %v299
        %v311 = vpack.c.b16 %v302, %v301
        %v312 = vpack.c.b16 %v304, %v303
        %321 = vmatpush.bf16.msra.mxu0 %v312
        %322 = vmatpush.bf16.msra.mxu0 %v311
        %323 = vmatpush.bf16.msra.mxu0 %v310
        %324 = vmatpush.bf16.msra.mxu0 %v309
        %325 = vmatpush.bf16.msra.mxu0 %v308
        %326 = vmatpush.bf16.msra.mxu0 %v307
        %327 = vmatpush.bf16.msra.mxu0 %v306
        %328 = vmatpush.bf16.msra.mxu0 %v305
        %329 = vmatmul.bf16.gmra.mxu0 %v256
        %v330 = vpop.f32.mrf.mxu0
        %v331 = vadd.f32 0.0, %v330
        %v332 = vpop.f32.mrf.mxu0
        %v333 = vadd.f32 0.0, %v332
        %334 = vdwg.mxu0
        %v335 = vpack.c.bf16 %v331, %v331
        %v336 = vpack.c.bf16 %v333, %v333
        %337 = vst [vmem:[%s226] sm:$0xf] %v335
        %338 = vst [vmem:[%s226 + $0x4] sm:$0xf] %v336
        %vm339 = vcmp.eq.s32.totalorder %v243, 127
        %v340 = vsel %vm339, -1e+09, %v331
        %v341 = vsel %vm339, -1e+09, %v333
        %342 = vmax.xlane.f32.xlu0 %v340
        %v343 = vpop.xlane.xlu0 %342
        %344 = vmax.xlane.f32.xlu0 %v341
        %v345 = vpop.xlane.xlu0 %344
        %v346 = vsub.f32 %v340, %v343
        %v347 = vsub.f32 %v341, %v345
        %v348 = vmul.f32 %v346, 1.442695
        %v349 = vpow.pop %v348
        %v350 = vmul.f32 %v347, 1.442695
        %v351 = vpow.pop %v350
        %352 = vadd.xlane.f32.xlu0 %v349
        %v353 = vpop.xlane.xlu0 %352
        %354 = vadd.xlane.f32.xlu0 %v351
        %v355 = vpop.xlane.xlu0 %354
        %v356 = vlog2.pop %v353
        %v357 = vmul.f32 %v356, 0.6931472
        %v358 = vlog2.pop %v355
        %v359 = vmul.f32 %v358, 0.6931472
        %v360 = vadd.f32 %v343, %v357
        %v361 = vadd.f32 %v345, %v359
        %362 = vset.pattern.permute.xlu0 1
        %363 = vperm.xlu0 %362, %v240
        %v364 = vpop.permute.xlu0 %363
        %365 = vset.pattern.permute.xlu0 1
        %366 = vperm.xlu0 %365, %v241
        %v367 = vpop.permute.xlu0 %366
        %vm368 = vcmp.eq.s32.totalorder %v243, %v364
        %vm369 = vcmp.eq.s32.totalorder %v243, %v367
        %v370 = vsel %vm368, %v340, 0.0
        %v371 = vsel %vm369, %v341, 0.0
        %372 = vadd.xlane.f32.xlu0 %v370
        %v373 = vpop.xlane.xlu0 %372
        %374 = vadd.xlane.f32.xlu0 %v371
        %v375 = vpop.xlane.xlu0 %374
        %v376 = vsub.f32 %v373, %v360
        %v377 = vsub.f32 %v375, %v361
        %vm378 = vcmp.eq.f32.partialorder %v373, %v343
        %vm379 = vcmp.eq.f32.partialorder %v375, %v345
        %v380 = vsel %vm378, 1, 0
        %v381 = vsel %vm379, 1, 0
        %v382 = vcvt.s32.f32 %v380
        %v383 = vcvt.s32.f32 %v381
        %vm384 = vcmp.ne.s32.totalorder %v240, 127
        %vm385 = vcmp.ne.s32.totalorder %v241, 127
        %vm386 = vcmp.eq.s32.totalorder %v240, 127
        %vm387 = vcmp.eq.s32.totalorder %v241, 127
        %v388 = vsel %vm386, 1, 0
        %v389 = vsel %vm387, 1, 0
        %390 = vrot.lane.b32.xlu0 %v388, 1
        %v391 = vpop.permute.xlu0 %390
        %392 = vrot.lane.b32.xlu0 %v389, 1
        %v393 = vpop.permute.xlu0 %392
        %vm394 = vcmp.ne.s32.totalorder %v391, 0
        %vm395 = vcmp.ne.s32.totalorder %v393, 0
        %vm396 = vmand %vm384, %vm394
        %vm397 = vmand %vm385, %vm395
        %vm398 = vcmp.ne.s32.totalorder %v240, 0
        %vm399 = vcmp.ne.s32.totalorder %v241, 0
        %v400 = vsel %vm396, 1, 0
        %v401 = vsel %vm397, 1, 0
        %402 = vrot.lane.b32.xlu0 %v400, 1
        %v403 = vpop.permute.xlu0 %402
        %404 = vrot.lane.b32.xlu0 %v401, 1
        %v405 = vpop.permute.xlu0 %404
        %vm406 = vcmp.ne.s32.totalorder %v403, 0
        %vm407 = vcmp.ne.s32.totalorder %v405, 0
        %vm408 = vmand %vm398, %vm406
        %vm409 = vmand %vm399, %vm407
        %v410 = vsel %vm408, 1, 0
        %v411 = vsel %vm409, 1, 0
        %v412 = vcvt.s32.f32 %v410
        %v413 = vcvt.s32.f32 %v411
        %s414 = sld [smem:[#allocation6 + %s24]]
        %v415 = vsub.f32 0.0, %v376
        %v416 = vsub.f32 0.0, %v377
        %v417 = vmul.f32 %v415, %v412
        %v418 = vmul.f32 %v416, %v413
        %v419 = vstv %s414
        %v420 = vmul.f32 %v417, %v419
        %v421 = vmul.f32 %v418, %v419
        %vm422 = vcmp.eq.s32.totalorder %v243, 0
        %vm423 = vcmp.eq.s32.totalorder %v243, 1
        %v424 = vmul.f32 %v382, %v412
        %v425 = vmul.f32 %v383, %v413
        %427 = vset.pattern.permute.xlu0 2
        %428 = vperm.xlu0 %427, %v412
        %v429 = vpop.permute.xlu0 %428
        %432 = vset.pattern.permute.xlu0 2
        %433 = vperm.xlu0 %432, %v413
        %v434 = vpop.permute.xlu0 %433
        %437 = vset.pattern.permute.xlu0 2
        %438 = vperm.xlu0 %437, %v424
        %v439 = vpop.permute.xlu0 %438
        %442 = vset.pattern.permute.xlu0 2
        %443 = vperm.xlu0 %442, %v425
        %v444 = vpop.permute.xlu0 %443
        %v446 = vsel %vm423, %v429, %v439
        %v447 = vsel %vm423, %v434, %v444
        %449 = vset.pattern.permute.xlu0 2
        %450 = vperm.xlu0 %449, %v420
        %v451 = vpop.permute.xlu0 %450
        %454 = vset.pattern.permute.xlu0 2
        %455 = vperm.xlu0 %454, %v421
        %v456 = vpop.permute.xlu0 %455
        %v458 = vsel %vm422, %v451, %v446
        %v459 = vsel %vm422, %v456, %v447
        %vm460 = vcmask 23552
        %v461 = vsel %vm460, %v458, 0.0
        %v462 = vsel %vm460, %v459, 0.0
        %v463 = vadd.f32 %v461, %v462
        %v464 = vrot.slane %v463, 4
        %v465 = vadd.f32 %v463, %v464
        %v466 = vrot.slane %v465, 2
        %v467 = vadd.f32 %v465, %v466
        %v468 = vrot.slane %v467, 1
        %v469 = vadd.f32 %v467, %v468
        %vm470 = vcmask 16384
        %471 = vst.msk [vmem:[%s232] sm:$0x1] %vm470, %v469
        %s472 = sand.u32 %s100, 1
        %s473 = scalar_lea.sflag [#allocation4], %s472
        %s474 = sand.u32 %s100, 1
        %s475 = smul.addr %s474, 8
        %s476 = scalar_lea.vmem [#allocation7], %s475
        %s477 = sand.u32 %s126, 1
        %s478 = scalar_lea.sflag [#allocation9], %s477
        %s479 = sand.u32 %s126, 1
        %s480 = scalar_lea.vmem [#allocation8], %s479
        // Predicated region
        $region41: #{tpu_custom_call.1} parent=31 // pred_check
          %p481 = pneg %p110
        $region42: #{tpu_custom_call.1} parent=31 // pred_check_branch
          %483 = sbr.rel (%p481) target = $region44
        $region43: #{tpu_custom_call.1} parent=31 // pred_region
          %s484 = smul.u32 2, %s24
          %486 = vsyncadd %s473, 0
          %s487 = smul.addr %s484, 4
          %s488 = scalar_lea.hbm %s3, %s487
          %s489 = sshll.u32 %s476, 4
          %s490 = int_to_ptr.vmem [resolvable:$true] %s489
          %s491 = sshll.u32 %s488, 4
          %s492 = int_to_ptr.hbm [resolvable:$true] %s491
          %497 = dma.vmem_to_hbm [thread:$0]  %s490, 128, %s492, %s473, 64, 64, 4
        $region44: #{tpu_custom_call.1} parent=31 // pred_fallthru
          _
        // Predicated region
        $region45: #{tpu_custom_call.1} parent=31 // pred_check
          %p498 = pneg %p136
        $region46: #{tpu_custom_call.1} parent=31 // pred_check_branch
          %500 = sbr.rel (%p498) target = $region48
        $region47: #{tpu_custom_call.1} parent=31 // pred_region
          %502 = vsyncadd %s478, 0
          %s503 = scalar_lea.hbm %s4, %s24
          %s505 = sshll.u32 %s480, 4
          %s506 = int_to_ptr.vmem [resolvable:$true] %s505
          %s507 = sshll.u32 %s503, 4
          %s508 = int_to_ptr.hbm [resolvable:$true] %s507
          %510 = dma.vmem_to_hbm [thread:$0]  %s506, 16, %s508, %s478
        $region48: #{tpu_custom_call.1} parent=31 // pred_fallthru
          _
      $region32: #{tpu_custom_call.1} parent=5 // pred_fallthru
        _
      %p511 = scmp.le.s32.totalorder 2, %s19
      // Predicated region
      $region49: #{tpu_custom_call.1} parent=5 // pred_check
        %p512 = pneg %p511
      $region50: #{tpu_custom_call.1} parent=5 // pred_check_branch
        %514 = sbr.rel (%p512) target = $region52
      $region51: #{tpu_custom_call.1} parent=5 // pred_region
        %s515 = ssub.s32 %s19, 2
        // Predicated region
        $region53: #{tpu_custom_call.1} parent=51 // pred_check
          %p516 = pneg %p116
        $region54: #{tpu_custom_call.1} parent=51 // pred_check_branch
          %518 = sbr.rel (%p516) target = $region56
        $region55: #{tpu_custom_call.1} parent=51 // pred_region
          %s519 = sand.u32 %s101, 1
          %s520 = scalar_lea.sflag [#allocation4], %s519
          %s521 = sand.u32 %s101, 1
          %s522 = smul.addr %s521, 8
          %s523 = scalar_lea.vmem [#allocation7], %s522
          %525 = dma.done %s520, 128
        $region56: #{tpu_custom_call.1} parent=51 // pred_fallthru
          _
        // Predicated region
        $region57: #{tpu_custom_call.1} parent=51 // pred_check
          %p526 = pneg %p142
        $region58: #{tpu_custom_call.1} parent=51 // pred_check_branch
          %528 = sbr.rel (%p526) target = $region60
        $region59: #{tpu_custom_call.1} parent=51 // pred_region
          %s529 = sand.u32 %s127, 1
          %s530 = scalar_lea.sflag [#allocation9], %s529
          %s531 = sand.u32 %s127, 1
          %s532 = scalar_lea.vmem [#allocation8], %s531
          %534 = dma.done %s530, 16
        $region60: #{tpu_custom_call.1} parent=51 // pred_fallthru
          _
      $region52: #{tpu_custom_call.1} parent=5 // pred_fallthru
        _
    $region6: #{tpu_custom_call.1} parent=1 // loop_footer
      %s23 = sadd.s32 1, %s19
    $region7: #{tpu_custom_call.1} parent=1 // loop_footer_branch
      %18 = sbr.rel target = $region3
    $region8: #{tpu_custom_call.1} parent=1 // loop_exit
      _
    %535 = vsyncpa [#allocation3], 1
    %s536 = scalar_lea.sflag [#allocation3], 1
    %537 = vsyncpa %s536, 1
    %538 = vsyncpa [#allocation4], 1
    %s539 = scalar_lea.sflag [#allocation4], 1
    %540 = vsyncpa %s539, 1
    %541 = vsyncpa [#allocation9], 1
    %s542 = scalar_lea.sflag [#allocation9], 1
    %543 = vsyncpa %s542, 1
    %544 = vsyncpa [#allocation5], 1
    %s545 = scalar_lea.sflag [#allocation5], 1
    %546 = vsyncpa %s545, 1

</llo_original>
